<compile_context>
chip_gen: v7x
topology: tpu7x:2x2x1
jax: 0.10.0
libtpu: 0.0.40
codegen_flags: <defaults>
</compile_context>

<pallas_src>
import functools

import jax
import jax.numpy as jnp
from jax.experimental import pallas as pl
from jax.experimental.pallas import tpu as pltpu


def _round_up(x: int, m: int) -> int:
    return ((x + m - 1) // m) * m


def _cdiv(a: int, b: int) -> int:
    return -(-a // b)


# --------------------------------------------------------------------------
# reconstruction + embedding kernel (O(N + N*D)), HBM-bandwidth bound
# --------------------------------------------------------------------------
def _rec_emb_kernel(yh_ref, y_ref, z_ref, out_ref, acc_ref, *, n, gamma, need_mask):
    g = pl.program_id(0)

    @pl.when(g == 0)
    def _():
        acc_ref[...] = jnp.zeros_like(acc_ref)
        dlt = yh_ref[...].astype(jnp.float32) - y_ref[...].astype(jnp.float32)
        out_ref[0] = (10.0 / n) * jnp.sum(dlt * dlt)

    z = z_ref[...].astype(jnp.float32)            # (tzr, d) natural-shape block
    zz = z * z
    if need_mask:                                 # static: only if last block is partial
        rows = z_ref.shape[0]
        row_ids = jax.lax.broadcasted_iota(jnp.int32, (rows, 1), 0) + g * rows
        zz = jnp.where(row_ids < n, zz, 0.0)      # OOB rows of the last block are garbage
    acc_ref[...] += jnp.sum(zz, axis=0, keepdims=True)   # (1, d) partial

    @pl.when(g == pl.num_programs(0) - 1)
    def _():
        out_ref[1] = (0.5 * gamma / n) * jnp.sum(acc_ref[...])


# --------------------------------------------------------------------------
# ranking-aware loss kernel (O(N^2)), VPU bound; only built when alpha != 0
# --------------------------------------------------------------------------
def _rank_kernel(yh_col_ref, y_col_ref, yh_row_ref, y_row_ref, out_ref,
                 *, n, tm, tn, row_pad, col_pad):
    i = pl.program_id(0)
    j = pl.program_id(1)
    nsub = tm // 8
    nchunk = tn // 128

    @pl.when(j == 0)
    def _():
        out_ref[...] = jnp.zeros_like(out_ref)    # (8,128) resident accumulator

    def tile_partial(masked: bool):
        def s_body(s, acc):
            base = pl.multiple_of(s * 8, 8)
            yh_c = yh_col_ref[pl.ds(base, 8), :].astype(jnp.float32)   # (8, 1)
            y_c = y_col_ref[pl.ds(base, 8), :].astype(jnp.float32)     # (8, 1)
            yh_cb = jnp.broadcast_to(yh_c, (8, 128))   # hoisted lane broadcast
            y_cb = jnp.broadcast_to(y_c, (8, 128))
            if masked:
                row_ok = (jax.lax.broadcasted_iota(jnp.int32, (8, 1), 0)
                          + (i * tm + base)) < n                        # (8, 1)
            for c in range(nchunk):                                     # small static loop
                yh_r = yh_row_ref[:, c * 128:(c + 1) * 128].astype(jnp.float32)  # (1,128)
                y_r = y_row_ref[:, c * 128:(c + 1) * 128].astype(jnp.float32)
                # sum(relu(-pd*yd)) == -sum(min(pd*yd, 0)); negate once outside.
                contrib = jnp.minimum((yh_cb - yh_r) * (y_cb - y_r), 0.0)
                if masked:
                    col_ok = (jax.lax.broadcasted_iota(jnp.int32, (1, 128), 1)
                              + (j * tn + c * 128)) < n                 # (1, 128)
                    contrib = jnp.where(row_ok & col_ok, contrib, 0.0)
                acc = acc + contrib
            return acc

        return jax.lax.fori_loop(0, nsub, s_body,
                                 jnp.zeros((8, 128), jnp.float32),
                                 unroll=min(4, nsub))

    if row_pad or col_pad:
        edge = jnp.logical_or(
            (i == pl.num_programs(0) - 1) if row_pad else jnp.bool_(False),
            (j == pl.num_programs(1) - 1) if col_pad else jnp.bool_(False))

        @pl.when(edge)                      # boundary tiles: masked path
        def _():
            out_ref[...] += tile_partial(True)

        @pl.when(jnp.logical_not(edge))     # interior tiles: unmasked fast path
        def _():
            out_ref[...] += tile_partial(False)
    else:
        out_ref[...] += tile_partial(False)


# --------------------------------------------------------------------------
# wrapper
# --------------------------------------------------------------------------
def vae_loss(y_hat, y, z, gamma: float = 1.0, alpha: float = 0.0):
    n = int(y.shape[0])
    d = int(z.shape[-1])
    gamma = float(gamma)
    alpha = float(alpha)

    # lane-dense (1, N) views of y_hat / y; full-dim blocks so no padding needed.
    yh_row = y_hat.reshape(1, n)
    y_row = y.reshape(1, n)
    z2 = z.reshape(n, d)

    # ---- reconstruction + embedding ----
    # ~1 MiB (lane-padded) z blocks so the pipeline is BW- not overhead-bound.
    d_pad = max(128, _round_up(d, 128))
    rows_budget = max(8, ((1 << 20) // (4 * d_pad)) // 8 * 8)
    tzr = max(8, min(_round_up(n, 8), rows_budget))
    gz = _cdiv(n, tzr)
    z_mask = (gz * tzr != n)

    rec_emb = pl.pallas_call(
        functools.partial(_rec_emb_kernel, n=n, gamma=gamma, need_mask=z_mask),
        out_shape=jax.ShapeDtypeStruct((2,), jnp.float32),
        grid_spec=pltpu.PrefetchScalarGridSpec(
            num_scalar_prefetch=0,
            grid=(gz,),
            in_specs=[
                pl.BlockSpec((1, n), lambda g: (0, 0)),
                pl.BlockSpec((1, n), lambda g: (0, 0)),
                pl.BlockSpec((tzr, d), lambda g: (g, 0)),
            ],
            out_specs=pl.BlockSpec(memory_space=pltpu.MemorySpace.SMEM),
            scratch_shapes=[pltpu.VMEM((1, d), jnp.float32)],
        ),
        compiler_params=pltpu.CompilerParams(
            dimension_semantics=("arbitrary",)),
        # TODO(synk): on v7x the z reduction could also be split across the two
        # TensorCores (parallel leading axis + per-core partials) for ~2x on emb.
    )(yh_row, y_row, z2)
    rec = rec_emb[0]
    emb = rec_emb[1]

    # ---- ranking-aware loss: statically skip the O(N^2) work if alpha == 0 ----
    if alpha != 0.0:
        # tm ~ ceil(n/2) so gi >= 2 (keeps both v7x TensorCores busy), capped so
        # the lane-padded (tm,1) column blocks stay ~0.5 MiB each in VMEM.
        tm = min(1024, max(8, _round_up(_cdiv(n, 2), 8)))
        tn = min(2048, _round_up(n, 128))
        gi = _cdiv(n, tm)
        gj = _cdiv(n, tn)
        row_pad = (gi * tm != n)
        col_pad = (gj * tn != n)

        yh_col = y_hat.reshape(n, 1)
        y_col = y.reshape(n, 1)

        partials = pl.pallas_call(
            functools.partial(_rank_kernel, n=n, tm=tm, tn=tn,
                              row_pad=row_pad, col_pad=col_pad),
            out_shape=jax.ShapeDtypeStruct((gi * 8, 128), jnp.float32),
            grid_spec=pltpu.PrefetchScalarGridSpec(
                num_scalar_prefetch=0,
                grid=(gi, gj),
                in_specs=[
                    pl.BlockSpec((tm, 1), lambda i, j: (i, 0)),
                    pl.BlockSpec((tm, 1), lambda i, j: (i, 0)),
                    pl.BlockSpec((1, tn), lambda i, j: (0, j)),
                    pl.BlockSpec((1, tn), lambda i, j: (0, j)),
                ],
                out_specs=pl.BlockSpec((8, 128), lambda i, j: (i, 0)),
            ),
            compiler_params=pltpu.CompilerParams(
                dimension_semantics=("parallel", "arbitrary")),
            cost_estimate=pl.CostEstimate(
                flops=4 * n * n,
                transcendentals=0,
                bytes_accessed=4 * (2 * n + 2 * n * gi) + gi * 8 * 128 * 4),
        )(yh_col, y_col, yh_row, y_row)
        rank = jnp.float32(alpha) * (-jnp.sum(partials))
    else:
        rank = jnp.float32(0.0)

    loss = rec + emb + rank
    return loss, rec, emb, rank


# --------------------------------------------------------------------------
# reference + test
# --------------------------------------------------------------------------
def _reference(y_hat, y, z, gamma, alpha):
    rec = 10.0 * jnp.mean((y_hat - y) ** 2)
    pred_diff = y_hat[:, None] - y_hat[None, :]
    y_diff = y[:, None] - y[None, :]
    rank = alpha * jnp.sum(jax.nn.relu(-pred_diff * y_diff))
    emb = gamma * jnp.mean(0.5 * jnp.sum(z * z, axis=-1))
    loss = rec + emb + rank
    return loss, rec, emb, rank


if __name__ == "__main__":
    def run_case(ns, dd, gamma, alpha, key):
        k1, k2, k3 = jax.random.split(key, 3)
        y_hat = jax.random.normal(k1, (ns,), dtype=jnp.float32)
        y = jax.random.normal(k2, (ns,), dtype=jnp.float32)
        z = jax.random.normal(k3, (ns, dd), dtype=jnp.float32)
        outs = jax.block_until_ready(
            vae_loss(y_hat, y, z, gamma=gamma, alpha=alpha))
        refs = _reference(y_hat, y, z, gamma, alpha)
        for o, r in zip(outs, refs):
            assert jnp.allclose(o, r, rtol=2e-4, atol=2e-4), (o, r)

    keys = jax.random.split(jax.random.PRNGKey(0), 4)
    # small shapes implied by the module: Ns=8 stocks, latent D=32
    run_case(8, 32, 1.0, 0.5, keys[0])
    # default alpha=0 path: ranking kernel statically skipped
    run_case(8, 32, 1.0, 0.0, keys[1])
    # odd sizes: boundary masking on rows / cols / z blocks, gi=2
    run_case(601, 96, 0.7, 0.3, keys[2])
    # multi-tile path: gi>1, gj>1, gz>1 (interior fast path + edge masked path)
    run_case(2500, 40, 1.3, 0.05, keys[3])

    print("KERNEL_OK")
</pallas_src>

<mosaic_0001>
module attributes {stable_mosaic.version = 11 : i64} {
  func.func @_rec_emb_kernel(%arg0: i32, %arg1: memref<1x8xf32, #tpu.memory_space<vmem>>, %arg2: memref<1x8xf32, #tpu.memory_space<vmem>>, %arg3: memref<8x32xf32, #tpu.memory_space<vmem>>, %arg4: memref<2xf32, #tpu.memory_space<smem>>, %arg5: memref<1x32xf32, #tpu.memory_space<vmem>>) attributes {dimension_semantics = [#tpu.dimension_semantics<arbitrary>], iteration_bounds = array<i64: 1>, scalar_prefetch = 0 : i64, scratch_operands = 1 : i64, tpu.core_type = #tpu.core_type<tc>, window_params = [{pipeline_mode = #tpu.pipeline_mode<synchronous>, transform_indices = @transform_0, window_bounds = array<i64: 1, 8>}, {pipeline_mode = #tpu.pipeline_mode<synchronous>, transform_indices = @transform_1, window_bounds = array<i64: 1, 8>}, {transform_indices = @transform_2, window_bounds = array<i64: 8, 32>}, {transform_indices = @transform_3, window_bounds = array<i64: 2>}]} {
    %c0_i32 = arith.constant 0 : i32
    %0 = arith.cmpi eq, %arg0, %c0_i32 : i32
    %1 = arith.extui %0 : i1 to i32
    %c0_i32_0 = arith.constant 0 : i32
    %2 = arith.cmpi ne, %1, %c0_i32_0 : i32
    scf.if %2 {
      %cst_8 = arith.constant 0.000000e+00 : f32
      %13 = vector.broadcast %cst_8 : f32 to vector<1x32xf32>
      %c0_9 = arith.constant 0 : index
      %c0_10 = arith.constant 0 : index
      %14 = vector.load %arg5[%c0_9, %c0_10] : memref<1x32xf32, #tpu.memory_space<vmem>>, vector<1x32xf32>
      tpu.vector_store %arg5[%c0_9, %c0_10], %13 {strides = array<i32>} : memref<1x32xf32, #tpu.memory_space<vmem>>, vector<1x32xf32>,
      %c0_11 = arith.constant 0 : index
      %c0_12 = arith.constant 0 : index
      %15 = vector.load %arg1[%c0_11, %c0_12] : memref<1x8xf32, #tpu.memory_space<vmem>>, vector<1x8xf32>
      %c0_13 = arith.constant 0 : index
      %c0_14 = arith.constant 0 : index
      %16 = vector.load %arg2[%c0_13, %c0_14] : memref<1x8xf32, #tpu.memory_space<vmem>>, vector<1x8xf32>
      %17 = arith.subf %15, %16 : vector<1x8xf32>
      %18 = arith.mulf %17, %17 : vector<1x8xf32>
      %19 = vector.shape_cast %18 : vector<1x8xf32> to vector<1x1x8xf32>
      %cst_15 = arith.constant dense<0.000000e+00> : vector<1xf32>
      %20 = vector.multi_reduction <add>, %19, %cst_15 [1, 2] : vector<1x1x8xf32> to vector<1xf32>
      %21 = vector.shape_cast %20 : vector<1xf32> to vector<1x1x1xf32>
      %22 = vector.extract %21[0, 0, 0] : f32 from vector<1x1x1xf32>
      %cst_16 = arith.constant 1.250000e+00 : f32
      %23 = arith.mulf %cst_16, %22 : f32
      %c0_17 = arith.constant 0 : index
      %24 = memref.load %arg4[%c0_17] : memref<2xf32, #tpu.memory_space<smem>>
      memref.store %23, %arg4[%c0_17] : memref<2xf32, #tpu.memory_space<smem>>
    } else {
    }
    %c0 = arith.constant 0 : index
    %c0_1 = arith.constant 0 : index
    %3 = vector.load %arg3[%c0, %c0_1] : memref<8x32xf32, #tpu.memory_space<vmem>>, vector<8x32xf32>
    %4 = arith.mulf %3, %3 : vector<8x32xf32>
    %c0_2 = arith.constant 0 : index
    %c0_3 = arith.constant 0 : index
    %5 = vector.load %arg5[%c0_2, %c0_3] : memref<1x32xf32, #tpu.memory_space<vmem>>, vector<1x32xf32>
    %cst = arith.constant dense<0.000000e+00> : vector<32xf32>
    %6 = vector.multi_reduction <add>, %4, %cst [0] : vector<8x32xf32> to vector<32xf32>
    %7 = vector.shape_cast %6 : vector<32xf32> to vector<1x32xf32>
    %8 = arith.addf %5, %7 : vector<1x32xf32>
    %c0_4 = arith.constant 0 : index
    %c0_5 = arith.constant 0 : index
    %9 = vector.load %arg5[%c0_4, %c0_5] : memref<1x32xf32, #tpu.memory_space<vmem>>, vector<1x32xf32>
    tpu.vector_store %arg5[%c0_4, %c0_5], %8 {strides = array<i32>} : memref<1x32xf32, #tpu.memory_space<vmem>>, vector<1x32xf32>,
    %c0_i32_6 = arith.constant 0 : i32
    %10 = arith.cmpi eq, %arg0, %c0_i32_6 : i32
    %11 = arith.extui %10 : i1 to i32
    %c0_i32_7 = arith.constant 0 : i32
    %12 = arith.cmpi ne, %11, %c0_i32_7 : i32
    scf.if %12 {
      %c0_8 = arith.constant 0 : index
      %c0_9 = arith.constant 0 : index
      %13 = vector.load %arg5[%c0_8, %c0_9] : memref<1x32xf32, #tpu.memory_space<vmem>>, vector<1x32xf32>
      %14 = vector.shape_cast %13 : vector<1x32xf32> to vector<1x1x32xf32>
      %cst_10 = arith.constant dense<0.000000e+00> : vector<1xf32>
      %15 = vector.multi_reduction <add>, %14, %cst_10 [1, 2] : vector<1x1x32xf32> to vector<1xf32>
      %16 = vector.shape_cast %15 : vector<1xf32> to vector<1x1x1xf32>
      %17 = vector.extract %16[0, 0, 0] : f32 from vector<1x1x1xf32>
      %cst_11 = arith.constant 6.250000e-02 : f32
      %18 = arith.mulf %cst_11, %17 : f32
      %c1 = arith.constant 1 : index
      %19 = memref.load %arg4[%c1] : memref<2xf32, #tpu.memory_space<smem>>
      memref.store %18, %arg4[%c1] : memref<2xf32, #tpu.memory_space<smem>>
    } else {
    }
    return
  }
  func.func @transform_0(%arg0: i32) -> (i32, i32) {
    %c0_i32 = arith.constant 0 : i32
    %c0_i32_0 = arith.constant 0 : i32
    %c0_i32_1 = arith.constant 0 : i32
    return %c0_i32, %c0_i32_0 : i32, i32
  }
  func.func @transform_1(%arg0: i32) -> (i32, i32) {
    %c0_i32 = arith.constant 0 : i32
    %c0_i32_0 = arith.constant 0 : i32
    %c0_i32_1 = arith.constant 0 : i32
    return %c0_i32, %c0_i32_0 : i32, i32
  }
  func.func @transform_2(%arg0: i32) -> (i32, i32) {
    %c0_i32 = arith.constant 0 : i32
    %c0_i32_0 = arith.constant 0 : i32
    return %arg0, %c0_i32 : i32, i32
  }
  func.func @transform_3(%arg0: i32) -> i32 {
    %c0_i32 = arith.constant 0 : i32
    %c0_i32_0 = arith.constant 0 : i32
    return %c0_i32 : i32
  }
}

</mosaic_0001>

<llo_original>
// kernel: tpu_custom_call.1
$region0: #{tpu_custom_call.1}
  #allocation0 [shape = 'u32[]', space=smem, size = 0x4, offset = 0x4, fixed_abs, tag = 'smem constant byte address 0x4 - core index']
  #allocation1 [shape = 'u32[144,128]{1,0:T(1,128)}', space=vmem, size = 0x12000, scoped, tag = 'internal scratch']
  #allocation2 [shape = 'f32[1,32]{1,0:T(1,128)}', space=vmem, size = 0x200, scoped, tag = 'scratch operand']
  %s0 = inlined_call_operand.hbm [shape: f32[1,8], index: 0, kind: input, shape index: {}]
  %s1 = inlined_call_operand.vmem [shape: f32[1,8], index: 1, kind: input, shape index: {}]
  %s2 = inlined_call_operand.hbm [shape: f32[8,32], index: 2, kind: input, shape index: {}]
  %s3 = inlined_call_operand.hbm [shape: f32[2], index: 3, kind: output, shape index: {}]
  %s4 = sld [smem:[#allocation0]]
  $region38: #{tpu_custom_call.1} parent=0
    _
  %s6 = ssub.s32 1, %s4
  %s7 = scalar_select 0, %s6, %s4
  $region1: #{tpu_custom_call.1} parent=0
    #allocation3 [shape = 'u8[512]{0}', space=vmem, size = 0x400, scoped, tag = 'input window, operand 0, single buffered']
    #allocation4 [shape = 's32[1]{0}', space=sflag, size = 0x4, scoped, tag = 'scoped memory for tpu_custom_call.1']
    #allocation5 [shape = 's32[1]{0}', space=sflag, size = 0x4, scoped, tag = 'scoped memory for tpu_custom_call.1']
    #allocation6 [shape = 'u8[4096]{0}', space=vmem, size = 0x1000, scoped, tag = 'input window, operand 2, single buffered']
    #allocation7 [shape = 's32[1]{0}', space=sflag, size = 0x4, scoped, tag = 'scoped memory for tpu_custom_call.1']
    #allocation8 [shape = 'u8[512]{0}', space=smem, size = 0x200, scoped, tag = 'output window, operand 0, single buffered']
    %8 = vsyncpa [#allocation4], 0
    %9 = vsyncpa [#allocation7], 0
    %10 = vsyncpa [#allocation5], 0
    // Predicated region
    $region2: #{tpu_custom_call.1} parent=1 // pred_check
      _
    $region3: #{tpu_custom_call.1} parent=1 // pred_check_branch
      %12 = sbr.rel (0) target = $region5
    $region4: #{tpu_custom_call.1} parent=1 // pred_region
      %s14 = ssub.s32 16, 16
      %15 = vsyncadd [#allocation4], %s14
      %s17 = sshll.u32 [#allocation3], 4
      %s18 = int_to_ptr.vmem [resolvable:$true] %s17
      %20 = dma.hbm_to_vmem [thread:$0]  %s0, 16, %s18, [#allocation4]
    $region5: #{tpu_custom_call.1} parent=1 // pred_fallthru
      _
    // Predicated region
    $region6: #{tpu_custom_call.1} parent=1 // pred_check
      _
    $region7: #{tpu_custom_call.1} parent=1 // pred_check_branch
      %22 = sbr.rel (0) target = $region9
    $region8: #{tpu_custom_call.1} parent=1 // pred_region
      _
    $region9: #{tpu_custom_call.1} parent=1 // pred_fallthru
      _
    // Predicated region
    $region10: #{tpu_custom_call.1} parent=1 // pred_check
      _
    $region11: #{tpu_custom_call.1} parent=1 // pred_check_branch
      %24 = sbr.rel (0) target = $region13
    $region12: #{tpu_custom_call.1} parent=1 // pred_region
      %s26 = ssub.s32 128, 128
      %27 = vsyncadd [#allocation7], %s26
      %s29 = sshll.u32 [#allocation6], 4
      %s30 = int_to_ptr.vmem [resolvable:$true] %s29
      %32 = dma.hbm_to_vmem [thread:$0]  %s2, 128, %s30, [#allocation7]
    $region13: #{tpu_custom_call.1} parent=1 // pred_fallthru
      _
    // Predicated region
    $region14: #{tpu_custom_call.1} parent=1 // pred_check
      _
    $region15: #{tpu_custom_call.1} parent=1 // pred_check_branch
      %34 = sbr.rel (0) target = $region17
    $region16: #{tpu_custom_call.1} parent=1 // pred_region
      %35 = dma.done [#allocation4], 16
    $region17: #{tpu_custom_call.1} parent=1 // pred_fallthru
      _
    // Predicated region
    $region18: #{tpu_custom_call.1} parent=1 // pred_check
      _
    $region19: #{tpu_custom_call.1} parent=1 // pred_check_branch
      %37 = sbr.rel (0) target = $region21
    $region20: #{tpu_custom_call.1} parent=1 // pred_region
      %38 = dma.done [#allocation7], 128
    $region21: #{tpu_custom_call.1} parent=1 // pred_fallthru
      _
    %p39 = scmp.eq.s32.totalorder 0, 0
    // Predicated region
    $region22: #{tpu_custom_call.1} parent=1 // pred_check
      %p40 = pneg %p39
    $region23: #{tpu_custom_call.1} parent=1 // pred_check_branch
      %42 = sbr.rel (%p40) target = $region25
    $region24: #{tpu_custom_call.1} parent=1 // pred_region
      %vm43 = vcmask 253952
      %44 = vst.msk [vmem:[#allocation2] sm:$0x1] %vm43, 0.0
      %v45 = vld [vmem:[#allocation3] sm:$0x1]
      %v46 = vld [vmem:[%s1] sm:$0x1]
      %v47 = vsub.f32 %v45, %v46
      %v48 = vmul.f32 %v47, %v47
      %vm49 = vcmask 57344
      %v50 = vsel %vm49, %v48, 0.0
      %51 = vadd.xlane.f32.xlu0 %v50
      %v52 = vpop.xlane.xlu0 %51
      %v53 = vrot.slane %v52, 4
      %v54 = vadd.f32 %v52, %v53
      %v55 = vrot.slane %v54, 2
      %v56 = vadd.f32 %v54, %v55
      %v57 = vrot.slane %v56, 1
      %v58 = vadd.f32 %v56, %v57
      %s59 = vtos %v58
      %s60 = smul.f32 %s59, 1.25
      %s61 = scalar_lea.smem [#allocation8], 0
      %62 = sst [smem:[%s61]] %s60
    $region25: #{tpu_custom_call.1} parent=1 // pred_fallthru
      _
    %v63 = vld [vmem:[#allocation6] sm:$0xff]
    %v64 = vmul.f32 %v63, %v63
    %v65 = vld [vmem:[#allocation2] sm:$0x1]
    %vm66 = vcmask 261120
    %v67 = vsel %vm66, %v64, 0.0
    %v68 = vrot.slane %v67, 4
    %v69 = vadd.f32 %v67, %v68
    %v70 = vrot.slane %v69, 2
    %v71 = vadd.f32 %v69, %v70
    %v72 = vrot.slane %v71, 1
    %v73 = vadd.f32 %v71, %v72
    %v74 = vadd.f32 %v65, %v73
    %vm75 = vcmask 253952
    %76 = vst.msk [vmem:[#allocation2] sm:$0x1] %vm75, %v74
    // Predicated region
    $region26: #{tpu_custom_call.1} parent=1 // pred_check
      %p77 = pneg %p39
    $region27: #{tpu_custom_call.1} parent=1 // pred_check_branch
      %79 = sbr.rel (%p77) target = $region29
    $region28: #{tpu_custom_call.1} parent=1 // pred_region
      %v80 = vld [vmem:[#allocation2] sm:$0x1]
      %v81 = vsel %vm75, %v80, 0.0
      %82 = vadd.xlane.f32.xlu0 %v81
      %v83 = vpop.xlane.xlu0 %82
      %v84 = vrot.slane %v83, 4
      %v85 = vadd.f32 %v83, %v84
      %v86 = vrot.slane %v85, 2
      %v87 = vadd.f32 %v85, %v86
      %v88 = vrot.slane %v87, 1
      %v89 = vadd.f32 %v87, %v88
      %s90 = vtos %v89
      %s91 = smul.f32 %s90, 0.0625
      %s92 = scalar_lea.smem [#allocation8], 1
      %93 = sst [smem:[%s92]] %s91
    $region29: #{tpu_custom_call.1} parent=1 // pred_fallthru
      _
    // Predicated region
    $region30: #{tpu_custom_call.1} parent=1 // pred_check
      _
    $region31: #{tpu_custom_call.1} parent=1 // pred_check_branch
      %95 = sbr.rel (0) target = $region33
    $region32: #{tpu_custom_call.1} parent=1 // pred_region
      %s97 = ssub.s32 16, 16
      %98 = vsyncadd [#allocation5], %s97
      %101 = dma.smem_to_hbm [#allocation8], 16, %s3, [#allocation5]
    $region33: #{tpu_custom_call.1} parent=1 // pred_fallthru
      _
    // Predicated region
    $region34: #{tpu_custom_call.1} parent=1 // pred_check
      _
    $region35: #{tpu_custom_call.1} parent=1 // pred_check_branch
      %103 = sbr.rel (0) target = $region37
    $region36: #{tpu_custom_call.1} parent=1 // pred_region
      %104 = dma.done [#allocation5], 16
    $region37: #{tpu_custom_call.1} parent=1 // pred_fallthru
      _
    %105 = sfence
    %106 = vsyncpa [#allocation4], 1
    %107 = vsyncpa [#allocation7], 1
    %108 = vsyncpa [#allocation5], 1

</llo_original>
